<compile_context>
chip_gen: v6e
topology: v6e:2x2x1
jax: 0.10.0
libtpu: 0.0.40
codegen_flags: <defaults>
</compile_context>

<pallas_src>
import jax
import jax.numpy as jnp
from jax.experimental import pallas as pl
from jax.experimental.pallas import tpu as pltpu

IN_FEATURES = 1536
HIDDEN = 225
HIDDEN_PAD = 256     # hidden dim zero-padded to a multiple of 128 (exact)
OUT_FEATURES = 15
OUT_PAD = 128        # output dim zero-padded -> lane-dense stores (exact)


def _round_up(n, m):
    return ((n + m - 1) // m) * m


def _default_batch_tile():
    """Per-generation default batch tile: 2048 on v6e/v7x, 1024 on v5e/other."""
    try:
        kind = jax.devices()[0].device_kind.lower()
    except Exception:
        return 1024
    if any(tag in kind for tag in ("v7", "7x", "v6")):
        return 2048
    return 1024


def _mlp_kernel(x_ref, w1_ref, b1_ref, w2_ref, b2_ref, o_ref):
    # Cast X to bf16 inside VMEM (no HBM cost) -> single-pass MXU, f32 accumulate.
    x = x_ref[...].astype(jnp.bfloat16)
    h = jnp.dot(x, w1_ref[...], preferred_element_type=jnp.float32)
    h = jnp.maximum(h + b1_ref[...], 0.0)                 # bias + ReLU in f32 (VPU)
    # Second linear is flop-trivial; bf16 operands keep it a single MXU pass.
    y = jnp.dot(h.astype(jnp.bfloat16), w2_ref[...],
                preferred_element_type=jnp.float32)
    o_ref[...] = (y + b2_ref[...]).astype(o_ref.dtype)    # lane-dense (tb, 128) store


def prepare_params(w1, b1, w2, b2):
    """One-time weight prep (hoisted out of the per-call path).

    Zero-pads hidden 225->256 and output 15->128 (numerically exact: padded
    rows/cols contribute 0 and padded output cols are sliced off) and stores
    the weight matrices in bf16 for single-pass MXU matmuls.
    """
    w1p = jnp.pad(w1, ((0, 0), (0, HIDDEN_PAD - HIDDEN))).astype(jnp.bfloat16)
    b1p = jnp.pad(b1.reshape(1, HIDDEN).astype(jnp.float32),
                  ((0, 0), (0, HIDDEN_PAD - HIDDEN)))
    w2p = jnp.pad(w2, ((0, HIDDEN_PAD - HIDDEN),
                       (0, OUT_PAD - OUT_FEATURES))).astype(jnp.bfloat16)
    b2p = jnp.pad(b2.reshape(1, OUT_FEATURES).astype(jnp.float32),
                  ((0, 0), (0, OUT_PAD - OUT_FEATURES)))
    return w1p, b1p, w2p, b2p


def output_layer_inceptionv4(x, params, *, batch_tile=None):
    """x: (B, 1536), any float dtype (pass bf16 from the producer to halve the
    dominant HBM read). params: output of prepare_params(). Returns (B, 3, 5) f32."""
    w1p, b1p, w2p, b2p = params
    B = x.shape[0]

    if batch_tile is None:
        batch_tile = _default_batch_tile()
    # Tile is a multiple of 16 (bf16 packs 16 sublanes/vreg). No wrapper-side pad
    # of X: the cdiv grid + Pallas boundary-block masking handle a ragged tail.
    tb = min(_round_up(batch_tile, 16), _round_up(B, 16))
    num_tiles = pl.cdiv(B, tb)

    cost = pl.CostEstimate(
        flops=2 * B * IN_FEATURES * HIDDEN_PAD + 2 * B * HIDDEN_PAD * OUT_PAD,
        transcendentals=0,
        bytes_accessed=(x.size * x.dtype.itemsize
                        + w1p.size * 2 + b1p.size * 4
                        + w2p.size * 2 + b2p.size * 4
                        + B * OUT_PAD * 4),
    )

    y = pl.pallas_call(
        _mlp_kernel,
        out_shape=jax.ShapeDtypeStruct((B, OUT_PAD), jnp.float32),
        grid=(num_tiles,),
        in_specs=[
            # X: streamed tile-by-tile along the batch axis.
            pl.BlockSpec((tb, IN_FEATURES), lambda i: (i, 0)),
            # Weights / biases: constant index_map -> VMEM-resident across steps.
            pl.BlockSpec((IN_FEATURES, HIDDEN_PAD), lambda i: (0, 0)),
            pl.BlockSpec((1, HIDDEN_PAD), lambda i: (0, 0)),
            pl.BlockSpec((HIDDEN_PAD, OUT_PAD), lambda i: (0, 0)),
            pl.BlockSpec((1, OUT_PAD), lambda i: (0, 0)),
        ],
        out_specs=pl.BlockSpec((tb, OUT_PAD), lambda i: (i, 0)),
        compiler_params=pltpu.CompilerParams(
            # Single tile: keep it on one TC (don't duplicate the W1 DMA on v7x).
            dimension_semantics=("arbitrary",) if num_tiles == 1 else ("parallel",),
            vmem_limit_bytes=48 << 20,
        ),
        cost_estimate=cost,
    )(x, w1p, b1p, w2p, b2p)

    # Drop the zero output padding; Reshape(-1, 3, 5) is pure layout glue.
    return y[:, :OUT_FEATURES].reshape(-1, 3, 5)


def _init_params(key):
    """Deterministic init mimicking nn.Linear default (uniform +/- 1/sqrt(fan_in))."""
    k1, k2, k3, k4 = jax.random.split(key, 4)
    bound1 = 1.0 / (IN_FEATURES ** 0.5)
    bound2 = 1.0 / (HIDDEN ** 0.5)
    w1 = jax.random.uniform(k1, (IN_FEATURES, HIDDEN), jnp.float32, -bound1, bound1)
    b1 = jax.random.uniform(k2, (HIDDEN,), jnp.float32, -bound1, bound1)
    w2 = jax.random.uniform(k3, (HIDDEN, OUT_FEATURES), jnp.float32, -bound2, bound2)
    b2 = jax.random.uniform(k4, (OUT_FEATURES,), jnp.float32, -bound2, bound2)
    return w1, b1, w2, b2


if __name__ == "__main__":
    key = jax.random.PRNGKey(0)
    k_x, k_p = jax.random.split(key)

    B = 16   # small demo batch (multiple of 16 -> one exact bf16-friendly tile)
    x = jax.random.normal(k_x, (B, IN_FEATURES), jnp.float32)
    w1, b1, w2, b2 = _init_params(k_p)

    params = prepare_params(w1, b1, w2, b2)   # one-time, hoisted out of call path
    fwd = jax.jit(output_layer_inceptionv4)
    y = jax.block_until_ready(fwd(x, params))
    assert y.shape == (B, 3, 5), y.shape

    # Reference with the kernel's numerics (bf16 MXU operands, f32 accumulate).
    hb = jnp.dot(x.astype(jnp.bfloat16), w1.astype(jnp.bfloat16),
                 preferred_element_type=jnp.float32) + b1
    hb = jnp.maximum(hb, 0.0)
    ref_bf16 = (jnp.dot(hb.astype(jnp.bfloat16), w2.astype(jnp.bfloat16),
                        preferred_element_type=jnp.float32) + b2).reshape(-1, 3, 5)
    assert jnp.allclose(y, ref_bf16, atol=1e-2, rtol=1e-2), \
        "mismatch vs bf16-operand / f32-accumulate reference"

    # Full-f32 PyTorch-semantics reference; bf16 operand rounding stays inside.
    # TODO(synk): if strict f32 parity is ever required, keep weights f32 in
    # prepare_params and drop the in-kernel bf16 casts (kernel stays valid).
    h32 = jnp.maximum(
        jnp.dot(x, w1, precision=jax.lax.Precision.HIGHEST) + b1, 0.0)
    ref_f32 = (jnp.dot(h32, w2, precision=jax.lax.Precision.HIGHEST)
               + b2).reshape(-1, 3, 5)
    assert jnp.allclose(y, ref_f32, atol=5e-2, rtol=5e-2), "drift vs f32 reference"

    print("KERNEL_OK")
</pallas_src>

<mosaic_0001>
module attributes {stable_mosaic.version = 11 : i64} {
  func.func @_mlp_kernel(%arg0: i32, %arg1: memref<16x1536xf32, #tpu.memory_space<vmem>>, %arg2: memref<1536x256xbf16, #tpu.memory_space<vmem>>, %arg3: memref<1x256xf32, #tpu.memory_space<vmem>>, %arg4: memref<256x128xbf16, #tpu.memory_space<vmem>>, %arg5: memref<1x128xf32, #tpu.memory_space<vmem>>, %arg6: memref<16x128xf32, #tpu.memory_space<vmem>>) attributes {dimension_semantics = [#tpu.dimension_semantics<arbitrary>], iteration_bounds = array<i64: 1>, scalar_prefetch = 0 : i64, scratch_operands = 0 : i64, tpu.core_type = #tpu.core_type<tc>, window_params = [{transform_indices = @transform_0, window_bounds = array<i64: 16, 1536>}, {pipeline_mode = #tpu.pipeline_mode<synchronous>, transform_indices = @transform_1, window_bounds = array<i64: 1536, 256>}, {pipeline_mode = #tpu.pipeline_mode<synchronous>, transform_indices = @transform_2, window_bounds = array<i64: 1, 256>}, {pipeline_mode = #tpu.pipeline_mode<synchronous>, transform_indices = @transform_3, window_bounds = array<i64: 256, 128>}, {pipeline_mode = #tpu.pipeline_mode<synchronous>, transform_indices = @transform_4, window_bounds = array<i64: 1, 128>}, {transform_indices = @transform_5, window_bounds = array<i64: 16, 128>}]} {
    %c0 = arith.constant 0 : index
    %c0_0 = arith.constant 0 : index
    %0 = vector.load %arg1[%c0, %c0_0] : memref<16x1536xf32, #tpu.memory_space<vmem>>, vector<16x1536xf32>
    %1 = arith.truncf %0 : vector<16x1536xf32> to vector<16x1536xbf16>
    %c0_1 = arith.constant 0 : index
    %c0_2 = arith.constant 0 : index
    %2 = vector.load %arg2[%c0_1, %c0_2] : memref<1536x256xbf16, #tpu.memory_space<vmem>>, vector<1536x256xbf16>
    %cst = arith.constant dense<0.000000e+00> : vector<16x256xf32>
    %3 = tpu.matmul %1, %2, %cst {dimension_numbers = #tpu.dot_dimension_numbers<[1], [0], [0], [1], [0, 0, 1, 1], [], []>} : vector<16x1536xbf16>, vector<1536x256xbf16>, vector<16x256xf32> -> vector<16x256xf32>
    %c0_3 = arith.constant 0 : index
    %c0_4 = arith.constant 0 : index
    %4 = vector.load %arg3[%c0_3, %c0_4] : memref<1x256xf32, #tpu.memory_space<vmem>>, vector<1x256xf32>
    %5 = vector.broadcast %4 : vector<1x256xf32> to vector<16x256xf32>
    %6 = arith.addf %3, %5 : vector<16x256xf32>
    %cst_5 = arith.constant 0.000000e+00 : f32
    %7 = vector.broadcast %cst_5 : f32 to vector<16x256xf32>
    %8 = arith.maximumf %6, %7 : vector<16x256xf32>
    %9 = arith.truncf %8 : vector<16x256xf32> to vector<16x256xbf16>
    %c0_6 = arith.constant 0 : index
    %c0_7 = arith.constant 0 : index
    %10 = vector.load %arg4[%c0_6, %c0_7] : memref<256x128xbf16, #tpu.memory_space<vmem>>, vector<256x128xbf16>
    %cst_8 = arith.constant dense<0.000000e+00> : vector<16x128xf32>
    %11 = tpu.matmul %9, %10, %cst_8 {dimension_numbers = #tpu.dot_dimension_numbers<[1], [0], [0], [1], [0, 0, 1, 1], [], []>} : vector<16x256xbf16>, vector<256x128xbf16>, vector<16x128xf32> -> vector<16x128xf32>
    %c0_9 = arith.constant 0 : index
    %c0_10 = arith.constant 0 : index
    %12 = vector.load %arg5[%c0_9, %c0_10] : memref<1x128xf32, #tpu.memory_space<vmem>>, vector<1x128xf32>
    %13 = vector.broadcast %12 : vector<1x128xf32> to vector<16x128xf32>
    %14 = arith.addf %11, %13 : vector<16x128xf32>
    %c0_11 = arith.constant 0 : index
    %c0_12 = arith.constant 0 : index
    %15 = vector.load %arg6[%c0_11, %c0_12] : memref<16x128xf32, #tpu.memory_space<vmem>>, vector<16x128xf32>
    tpu.vector_store %arg6[%c0_11, %c0_12], %14 {strides = array<i32>} : memref<16x128xf32, #tpu.memory_space<vmem>>, vector<16x128xf32>,
    return
  }
  func.func @transform_0(%arg0: i32) -> (i32, i32) {
    %c0_i32 = arith.constant 0 : i32
    %c0_i32_0 = arith.constant 0 : i32
    return %arg0, %c0_i32 : i32, i32
  }
  func.func @transform_1(%arg0: i32) -> (i32, i32) {
    %c0_i32 = arith.constant 0 : i32
    %c0_i32_0 = arith.constant 0 : i32
    %c0_i32_1 = arith.constant 0 : i32
    return %c0_i32, %c0_i32_0 : i32, i32
  }
  func.func @transform_2(%arg0: i32) -> (i32, i32) {
    %c0_i32 = arith.constant 0 : i32
    %c0_i32_0 = arith.constant 0 : i32
    %c0_i32_1 = arith.constant 0 : i32
    return %c0_i32, %c0_i32_0 : i32, i32
  }
  func.func @transform_3(%arg0: i32) -> (i32, i32) {
    %c0_i32 = arith.constant 0 : i32
    %c0_i32_0 = arith.constant 0 : i32
    %c0_i32_1 = arith.constant 0 : i32
    return %c0_i32, %c0_i32_0 : i32, i32
  }
  func.func @transform_4(%arg0: i32) -> (i32, i32) {
    %c0_i32 = arith.constant 0 : i32
    %c0_i32_0 = arith.constant 0 : i32
    %c0_i32_1 = arith.constant 0 : i32
    return %c0_i32, %c0_i32_0 : i32, i32
  }
  func.func @transform_5(%arg0: i32) -> (i32, i32) {
    %c0_i32 = arith.constant 0 : i32
    %c0_i32_0 = arith.constant 0 : i32
    return %arg0, %c0_i32 : i32, i32
  }
}

</mosaic_0001>

<llo_original>
// kernel: output_layer_inceptionv4.1
$region0: #{output_layer_inceptionv4.1}
  #allocation0 [shape = 'u32[]', space=smem, size = 0x4, offset = 0x4, fixed_abs, tag = 'smem constant byte address 0x4 - core index']
  #allocation1 [shape = 'u32[144,128]{1,0:T(1,128)}', space=vmem, size = 0x12000, scoped, tag = 'internal scratch']
  %s0 = inlined_call_operand.hbm [shape: f32[16,1536], index: 0, kind: input, shape index: {}]
  %s1 = inlined_call_operand.hbm [shape: bf16[1536,256], index: 1, kind: input, shape index: {}]
  %s2 = inlined_call_operand.vmem [shape: f32[1,256], index: 2, kind: input, shape index: {}]
  %s3 = inlined_call_operand.hbm [shape: bf16[256,128], index: 3, kind: input, shape index: {}]
  %s4 = inlined_call_operand.vmem [shape: f32[1,128], index: 4, kind: input, shape index: {}]
  %s5 = inlined_call_operand.vmem [shape: f32[16,128], index: 5, kind: output, shape index: {}]
  %s6 = sld [smem:[#allocation0]]
  $region42: #{output_layer_inceptionv4.1} parent=0
    _
  %s8 = ssub.s32 1, %s6
  %s9 = scalar_select 0, %s8, %s6
  $region1: #{output_layer_inceptionv4.1} parent=0
    #allocation2 [shape = 'u8[98304]{0}', space=vmem, size = 0x18000, scoped, tag = 'input window, operand 0, single buffered']
    #allocation3 [shape = 's32[1]{0}', space=sflag, size = 0x4, scoped, tag = 'scoped memory for output_layer_inceptionv4.1']
    #allocation4 [shape = 'u8[786432]{0}', space=vmem, size = 0xc0000, scoped, tag = 'input window, operand 1, single buffered']
    #allocation5 [shape = 's32[1]{0}', space=sflag, size = 0x4, scoped, tag = 'scoped memory for output_layer_inceptionv4.1']
    #allocation6 [shape = 'u8[65536]{0}', space=vmem, size = 0x10000, scoped, tag = 'input window, operand 3, single buffered']
    %10 = vsyncpa [#allocation3], 0
    %11 = vsyncpa [#allocation5], 0
    // Predicated region
    $region2: #{output_layer_inceptionv4.1} parent=1 // pred_check
      _
    $region3: #{output_layer_inceptionv4.1} parent=1 // pred_check_branch
      %13 = sbr.rel (0) target = $region5
    $region4: #{output_layer_inceptionv4.1} parent=1 // pred_region
      %s15 = ssub.s32 3072, 3072
      %16 = vsyncadd [#allocation3], %s15
      %s17 = sshll.u32 [#allocation2], 4
      %s18 = int_to_ptr.vmem [resolvable:$true] %s17
      %23 = dma.hbm_to_vmem [thread:$0]  %s0, 3072, %s18, [#allocation3], 1536, 1536, 96
    $region5: #{output_layer_inceptionv4.1} parent=1 // pred_fallthru
      _
    // Predicated region
    $region6: #{output_layer_inceptionv4.1} parent=1 // pred_check
      _
    $region7: #{output_layer_inceptionv4.1} parent=1 // pred_check_branch
      %25 = sbr.rel (0) target = $region9
    $region8: #{output_layer_inceptionv4.1} parent=1 // pred_region
      %s27 = ssub.s32 24576, 24576
      %28 = vsyncadd [#allocation5], %s27
      %s29 = sshll.u32 [#allocation4], 4
      %s30 = int_to_ptr.vmem [resolvable:$true] %s29
      %35 = dma.hbm_to_vmem [thread:$0]  %s1, 24576, %s30, [#allocation5], 128, 128, 8
    $region9: #{output_layer_inceptionv4.1} parent=1 // pred_fallthru
      _
    // Predicated region
    $region10: #{output_layer_inceptionv4.1} parent=1 // pred_check
      _
    $region11: #{output_layer_inceptionv4.1} parent=1 // pred_check_branch
      %37 = sbr.rel (0) target = $region13
    $region12: #{output_layer_inceptionv4.1} parent=1 // pred_region
      _
    $region13: #{output_layer_inceptionv4.1} parent=1 // pred_fallthru
      _
    // Predicated region
    $region14: #{output_layer_inceptionv4.1} parent=1 // pred_check
      _
    $region15: #{output_layer_inceptionv4.1} parent=1 // pred_check_branch
      %39 = sbr.rel (0) target = $region17
    $region16: #{output_layer_inceptionv4.1} parent=1 // pred_region
      %s41 = ssub.s32 2048, 2048
      %42 = vsyncadd [#allocation5], %s41
      %s43 = sshll.u32 [#allocation6], 4
      %s44 = int_to_ptr.vmem [resolvable:$true] %s43
      %49 = dma.hbm_to_vmem [thread:$0]  %s3, 2048, %s44, [#allocation5], 64, 64, 4
    $region17: #{output_layer_inceptionv4.1} parent=1 // pred_fallthru
      _
    // Predicated region
    $region18: #{output_layer_inceptionv4.1} parent=1 // pred_check
      _
    $region19: #{output_layer_inceptionv4.1} parent=1 // pred_check_branch
      %51 = sbr.rel (0) target = $region21
    $region20: #{output_layer_inceptionv4.1} parent=1 // pred_region
      _
    $region21: #{output_layer_inceptionv4.1} parent=1 // pred_fallthru
      _
    // Predicated region
    $region22: #{output_layer_inceptionv4.1} parent=1 // pred_check
      _
    $region23: #{output_layer_inceptionv4.1} parent=1 // pred_check_branch
      %53 = sbr.rel (0) target = $region25
    $region24: #{output_layer_inceptionv4.1} parent=1 // pred_region
      %54 = dma.done [#allocation3], 3072
    $region25: #{output_layer_inceptionv4.1} parent=1 // pred_fallthru
      _
    // Predicated region
    $region26: #{output_layer_inceptionv4.1} parent=1 // pred_check
      _
    $region27: #{output_layer_inceptionv4.1} parent=1 // pred_check_branch
      %56 = sbr.rel (0) target = $region29
    $region28: #{output_layer_inceptionv4.1} parent=1 // pred_region
      %57 = dma.done [#allocation5], 24576
    $region29: #{output_layer_inceptionv4.1} parent=1 // pred_fallthru
      _
    // Predicated region
    $region30: #{output_layer_inceptionv4.1} parent=1 // pred_check
      _
    $region31: #{output_layer_inceptionv4.1} parent=1 // pred_check_branch
      %59 = sbr.rel (0) target = $region33
    $region32: #{output_layer_inceptionv4.1} parent=1 // pred_region
      %60 = dma.done [#allocation5], 2048
    $region33: #{output_layer_inceptionv4.1} parent=1 // pred_fallthru
      _
    %v62 = vld [vmem:[#allocation2] sm:$0xff]
    %v63 = vld [vmem:[#allocation2 + $0x8] sm:$0xff]
    %v64 = vld [vmem:[#allocation2 + $0x10] sm:$0xff]
    %v65 = vld [vmem:[#allocation2 + $0x18] sm:$0xff]
    %v66 = vld [vmem:[#allocation2 + $0x20] sm:$0xff]
    %v67 = vld [vmem:[#allocation2 + $0x28] sm:$0xff]
    %v68 = vld [vmem:[#allocation2 + $0x30] sm:$0xff]
    %v69 = vld [vmem:[#allocation2 + $0x38] sm:$0xff]
    %v70 = vld [vmem:[#allocation2 + $0x40] sm:$0xff]
    %v71 = vld [vmem:[#allocation2 + $0x48] sm:$0xff]
    %v72 = vld [vmem:[#allocation2 + $0x50] sm:$0xff]
    %v73 = vld [vmem:[#allocation2 + $0x58] sm:$0xff]
    %v74 = vld [vmem:[#allocation2 + $0x60] sm:$0xff]
    %v75 = vld [vmem:[#allocation2 + $0x68] sm:$0xff]
    %v76 = vld [vmem:[#allocation2 + $0x70] sm:$0xff]
    %v77 = vld [vmem:[#allocation2 + $0x78] sm:$0xff]
    %v78 = vld [vmem:[#allocation2 + $0x80] sm:$0xff]
    %v79 = vld [vmem:[#allocation2 + $0x88] sm:$0xff]
    %v80 = vld [vmem:[#allocation2 + $0x90] sm:$0xff]
    %v81 = vld [vmem:[#allocation2 + $0x98] sm:$0xff]
    %v82 = vld [vmem:[#allocation2 + $0xa0] sm:$0xff]
    %v83 = vld [vmem:[#allocation2 + $0xa8] sm:$0xff]
    %v84 = vld [vmem:[#allocation2 + $0xb0] sm:$0xff]
    %v85 = vld [vmem:[#allocation2 + $0xb8] sm:$0xff]
    %v86 = vpack.c.bf16 %v74, %v62
    %v87 = vpack.c.bf16 %v75, %v63
    %v88 = vpack.c.bf16 %v76, %v64
    %v89 = vpack.c.bf16 %v77, %v65
    %v90 = vpack.c.bf16 %v78, %v66
    %v91 = vpack.c.bf16 %v79, %v67
    %v92 = vpack.c.bf16 %v80, %v68
    %v93 = vpack.c.bf16 %v81, %v69
    %v94 = vpack.c.bf16 %v82, %v70
    %v95 = vpack.c.bf16 %v83, %v71
    %v96 = vpack.c.bf16 %v84, %v72
    %v97 = vpack.c.bf16 %v85, %v73
    %v98 = vld [vmem:[#allocation4] sm:$0xff]
    %v99 = vld [vmem:[#allocation4 + $0x8] sm:$0xff]
    %v100 = vld [vmem:[#allocation4 + $0x10] sm:$0xff]
    %v101 = vld [vmem:[#allocation4 + $0x18] sm:$0xff]
    %v102 = vld [vmem:[#allocation4 + $0x20] sm:$0xff]
    %v103 = vld [vmem:[#allocation4 + $0x28] sm:$0xff]
    %v104 = vld [vmem:[#allocation4 + $0x30] sm:$0xff]
    %v105 = vld [vmem:[#allocation4 + $0x38] sm:$0xff]
    %v106 = vld [vmem:[#allocation4 + $0x40] sm:$0xff]
    %v107 = vld [vmem:[#allocation4 + $0x48] sm:$0xff]
    %v108 = vld [vmem:[#allocation4 + $0x50] sm:$0xff]
    %v109 = vld [vmem:[#allocation4 + $0x58] sm:$0xff]
    %v110 = vld [vmem:[#allocation4 + $0x60] sm:$0xff]
    %v111 = vld [vmem:[#allocation4 + $0x68] sm:$0xff]
    %v112 = vld [vmem:[#allocation4 + $0x70] sm:$0xff]
    %v113 = vld [vmem:[#allocation4 + $0x78] sm:$0xff]
    %v114 = vld [vmem:[#allocation4 + $0x80] sm:$0xff]
    %v115 = vld [vmem:[#allocation4 + $0x88] sm:$0xff]
    %v116 = vld [vmem:[#allocation4 + $0x90] sm:$0xff]
    %v117 = vld [vmem:[#allocation4 + $0x98] sm:$0xff]
    %v118 = vld [vmem:[#allocation4 + $0xa0] sm:$0xff]
    %v119 = vld [vmem:[#allocation4 + $0xa8] sm:$0xff]
    %v120 = vld [vmem:[#allocation4 + $0xb0] sm:$0xff]
    %v121 = vld [vmem:[#allocation4 + $0xb8] sm:$0xff]
    %v122 = vld [vmem:[#allocation4 + $0xc0] sm:$0xff]
    %v123 = vld [vmem:[#allocation4 + $0xc8] sm:$0xff]
    %v124 = vld [vmem:[#allocation4 + $0xd0] sm:$0xff]
    %v125 = vld [vmem:[#allocation4 + $0xd8] sm:$0xff]
    %v126 = vld [vmem:[#allocation4 + $0xe0] sm:$0xff]
    %v127 = vld [vmem:[#allocation4 + $0xe8] sm:$0xff]
    %v128 = vld [vmem:[#allocation4 + $0xf0] sm:$0xff]
    %v129 = vld [vmem:[#allocation4 + $0xf8] sm:$0xff]
    %v130 = vld [vmem:[#allocation4 + $0x100] sm:$0xff]
    %v131 = vld [vmem:[#allocation4 + $0x108] sm:$0xff]
    %v132 = vld [vmem:[#allocation4 + $0x110] sm:$0xff]
    %v133 = vld [vmem:[#allocation4 + $0x118] sm:$0xff]
    %v134 = vld [vmem:[#allocation4 + $0x120] sm:$0xff]
    %v135 = vld [vmem:[#allocation4 + $0x128] sm:$0xff]
    %v136 = vld [vmem:[#allocation4 + $0x130] sm:$0xff]
    %v137 = vld [vmem:[#allocation4 + $0x138] sm:$0xff]
    %v138 = vld [vmem:[#allocation4 + $0x140] sm:$0xff]
    %v139 = vld [vmem:[#allocation4 + $0x148] sm:$0xff]
    %v140 = vld [vmem:[#allocation4 + $0x150] sm:$0xff]
    %v141 = vld [vmem:[#allocation4 + $0x158] sm:$0xff]
    %v142 = vld [vmem:[#allocation4 + $0x160] sm:$0xff]
    %v143 = vld [vmem:[#allocation4 + $0x168] sm:$0xff]
    %v144 = vld [vmem:[#allocation4 + $0x170] sm:$0xff]
    %v145 = vld [vmem:[#allocation4 + $0x178] sm:$0xff]
    %v146 = vld [vmem:[#allocation4 + $0x180] sm:$0xff]
    %v147 = vld [vmem:[#allocation4 + $0x188] sm:$0xff]
    %v148 = vld [vmem:[#allocation4 + $0x190] sm:$0xff]
    %v149 = vld [vmem:[#allocation4 + $0x198] sm:$0xff]
    %v150 = vld [vmem:[#allocation4 + $0x1a0] sm:$0xff]
    %v151 = vld [vmem:[#allocation4 + $0x1a8] sm:$0xff]
    %v152 = vld [vmem:[#allocation4 + $0x1b0] sm:$0xff]
    %v153 = vld [vmem:[#allocation4 + $0x1b8] sm:$0xff]
    %v154 = vld [vmem:[#allocation4 + $0x1c0] sm:$0xff]
    %v155 = vld [vmem:[#allocation4 + $0x1c8] sm:$0xff]
    %v156 = vld [vmem:[#allocation4 + $0x1d0] sm:$0xff]
    %v157 = vld [vmem:[#allocation4 + $0x1d8] sm:$0xff]
    %v158 = vld [vmem:[#allocation4 + $0x1e0] sm:$0xff]
    %v159 = vld [vmem:[#allocation4 + $0x1e8] sm:$0xff]
    %v160 = vld [vmem:[#allocation4 + $0x1f0] sm:$0xff]
    %v161 = vld [vmem:[#allocation4 + $0x1f8] sm:$0xff]
    %v162 = vld [vmem:[#allocation4 + $0x200] sm:$0xff]
    %v163 = vld [vmem:[#allocation4 + $0x208] sm:$0xff]
    %v164 = vld [vmem:[#allocation4 + $0x210] sm:$0xff]
    %v165 = vld [vmem:[#allocation4 + $0x218] sm:$0xff]
    %v166 = vld [vmem:[#allocation4 + $0x220] sm:$0xff]
    %v167 = vld [vmem:[#allocation4 + $0x228] sm:$0xff]
    %v168 = vld [vmem:[#allocation4 + $0x230] sm:$0xff]
    %v169 = vld [vmem:[#allocation4 + $0x238] sm:$0xff]
    %v170 = vld [vmem:[#allocation4 + $0x240] sm:$0xff]
    %v171 = vld [vmem:[#allocation4 + $0x248] sm:$0xff]
    %v172 = vld [vmem:[#allocation4 + $0x250] sm:$0xff]
    %v173 = vld [vmem:[#allocation4 + $0x258] sm:$0xff]
    %v174 = vld [vmem:[#allocation4 + $0x260] sm:$0xff]
    %v175 = vld [vmem:[#allocation4 + $0x268] sm:$0xff]
    %v176 = vld [vmem:[#allocation4 + $0x270] sm:$0xff]
    %v177 = vld [vmem:[#allocation4 + $0x278] sm:$0xff]
    %v178 = vld [vmem:[#allocation4 + $0x280] sm:$0xff]
    %v179 = vld [vmem:[#allocation4 + $0x288] sm:$0xff]
    %v180 = vld [vmem:[#allocation4 + $0x290] sm:$0xff]
    %v181 = vld [vmem:[#allocation4 + $0x298] sm:$0xff]
    %v182 = vld [vmem:[#allocation4 + $0x2a0] sm:$0xff]
    %v183 = vld [vmem:[#allocation4 + $0x2a8] sm:$0xff]
    %v184 = vld [vmem:[#allocation4 + $0x2b0] sm:$0xff]
    %v185 = vld [vmem:[#allocation4 + $0x2b8] sm:$0xff]
    %v186 = vld [vmem:[#allocation4 + $0x2c0] sm:$0xff]
    %v187 = vld [vmem:[#allocation4 + $0x2c8] sm:$0xff]
    %v188 = vld [vmem:[#allocation4 + $0x2d0] sm:$0xff]
    %v189 = vld [vmem:[#allocation4 + $0x2d8] sm:$0xff]
    %v190 = vld [vmem:[#allocation4 + $0x2e0] sm:$0xff]
    %v191 = vld [vmem:[#allocation4 + $0x2e8] sm:$0xff]
    %v192 = vld [vmem:[#allocation4 + $0x2f0] sm:$0xff]
    %v193 = vld [vmem:[#allocation4 + $0x2f8] sm:$0xff]
    %v194 = vld [vmem:[#allocation4 + $0x300] sm:$0xff]
    %v195 = vld [vmem:[#allocation4 + $0x308] sm:$0xff]
    %v196 = vld [vmem:[#allocation4 + $0x310] sm:$0xff]
    %v197 = vld [vmem:[#allocation4 + $0x318] sm:$0xff]
    %v198 = vld [vmem:[#allocation4 + $0x320] sm:$0xff]
    %v199 = vld [vmem:[#allocation4 + $0x328] sm:$0xff]
    %v200 = vld [vmem:[#allocation4 + $0x330] sm:$0xff]
    %v201 = vld [vmem:[#allocation4 + $0x338] sm:$0xff]
    %v202 = vld [vmem:[#allocation4 + $0x340] sm:$0xff]
    %v203 = vld [vmem:[#allocation4 + $0x348] sm:$0xff]
    %v204 = vld [vmem:[#allocation4 + $0x350] sm:$0xff]
    %v205 = vld [vmem:[#allocation4 + $0x358] sm:$0xff]
    %v206 = vld [vmem:[#allocation4 + $0x360] sm:$0xff]
    %v207 = vld [vmem:[#allocation4 + $0x368] sm:$0xff]
    %v208 = vld [vmem:[#allocation4 + $0x370] sm:$0xff]
    %v209 = vld [vmem:[#allocation4 + $0x378] sm:$0xff]
    %v210 = vld [vmem:[#allocation4 + $0x380] sm:$0xff]
    %v211 = vld [vmem:[#allocation4 + $0x388] sm:$0xff]
    %v212 = vld [vmem:[#allocation4 + $0x390] sm:$0xff]
    %v213 = vld [vmem:[#allocation4 + $0x398] sm:$0xff]
    %v214 = vld [vmem:[#allocation4 + $0x3a0] sm:$0xff]
    %v215 = vld [vmem:[#allocation4 + $0x3a8] sm:$0xff]
    %v216 = vld [vmem:[#allocation4 + $0x3b0] sm:$0xff]
    %v217 = vld [vmem:[#allocation4 + $0x3b8] sm:$0xff]
    %v218 = vld [vmem:[#allocation4 + $0x3c0] sm:$0xff]
    %v219 = vld [vmem:[#allocation4 + $0x3c8] sm:$0xff]
    %v220 = vld [vmem:[#allocation4 + $0x3d0] sm:$0xff]
    %v221 = vld [vmem:[#allocation4 + $0x3d8] sm:$0xff]
    %v222 = vld [vmem:[#allocation4 + $0x3e0] sm:$0xff]
    %v223 = vld [vmem:[#allocation4 + $0x3e8] sm:$0xff]
    %v224 = vld [vmem:[#allocation4 + $0x3f0] sm:$0xff]
    %v225 = vld [vmem:[#allocation4 + $0x3f8] sm:$0xff]
    %v226 = vld [vmem:[#allocation4 + $0x400] sm:$0xff]
    %v227 = vld [vmem:[#allocation4 + $0x408] sm:$0xff]
    %v228 = vld [vmem:[#allocation4 + $0x410] sm:$0xff]
    %v229 = vld [vmem:[#allocation4 + $0x418] sm:$0xff]
    %v230 = vld [vmem:[#allocation4 + $0x420] sm:$0xff]
    %v231 = vld [vmem:[#allocation4 + $0x428] sm:$0xff]
    %v232 = vld [vmem:[#allocation4 + $0x430] sm:$0xff]
    %v233 = vld [vmem:[#allocation4 + $0x438] sm:$0xff]
    %v234 = vld [vmem:[#allocation4 + $0x440] sm:$0xff]
    %v235 = vld [vmem:[#allocation4 + $0x448] sm:$0xff]
    %v236 = vld [vmem:[#allocation4 + $0x450] sm:$0xff]
    %v237 = vld [vmem:[#allocation4 + $0x458] sm:$0xff]
    %v238 = vld [vmem:[#allocation4 + $0x460] sm:$0xff]
    %v239 = vld [vmem:[#allocation4 + $0x468] sm:$0xff]
    %v240 = vld [vmem:[#allocation4 + $0x470] sm:$0xff]
    %v241 = vld [vmem:[#allocation4 + $0x478] sm:$0xff]
    %v242 = vld [vmem:[#allocation4 + $0x480] sm:$0xff]
    %v243 = vld [vmem:[#allocation4 + $0x488] sm:$0xff]
    %v244 = vld [vmem:[#allocation4 + $0x490] sm:$0xff]
    %v245 = vld [vmem:[#allocation4 + $0x498] sm:$0xff]
    %v246 = vld [vmem:[#allocation4 + $0x4a0] sm:$0xff]
    %v247 = vld [vmem:[#allocation4 + $0x4a8] sm:$0xff]
    %v248 = vld [vmem:[#allocation4 + $0x4b0] sm:$0xff]
    %v249 = vld [vmem:[#allocation4 + $0x4b8] sm:$0xff]
    %v250 = vld [vmem:[#allocation4 + $0x4c0] sm:$0xff]
    %v251 = vld [vmem:[#allocation4 + $0x4c8] sm:$0xff]
    %v252 = vld [vmem:[#allocation4 + $0x4d0] sm:$0xff]
    %v253 = vld [vmem:[#allocation4 + $0x4d8] sm:$0xff]
    %v254 = vld [vmem:[#allocation4 + $0x4e0] sm:$0xff]
    %v255 = vld [vmem:[#allocation4 + $0x4e8] sm:$0xff]
    %v256 = vld [vmem:[#allocation4 + $0x4f0] sm:$0xff]
    %v257 = vld [vmem:[#allocation4 + $0x4f8] sm:$0xff]
    %v258 = vld [vmem:[#allocation4 + $0x500] sm:$0xff]
    %v259 = vld [vmem:[#allocation4 + $0x508] sm:$0xff]
    %v260 = vld [vmem:[#allocation4 + $0x510] sm:$0xff]
    %v261 = vld [vmem:[#allocation4 + $0x518] sm:$0xff]
    %v262 = vld [vmem:[#allocation4 + $0x520] sm:$0xff]
    %v263 = vld [vmem:[#allocation4 + $0x528] sm:$0xff]
    %v264 = vld [vmem:[#allocation4 + $0x530] sm:$0xff]
    %v265 = vld [vmem:[#allocation4 + $0x538] sm:$0xff]
    %v266 = vld [vmem:[#allocation4 + $0x540] sm:$0xff]
    %v267 = vld [vmem:[#allocation4 + $0x548] sm:$0xff]
    %v268 = vld [vmem:[#allocation4 + $0x550] sm:$0xff]
    %v269 = vld [vmem:[#allocation4 + $0x558] sm:$0xff]
    %v270 = vld [vmem:[#allocation4 + $0x560] sm:$0xff]
    %v271 = vld [vmem:[#allocation4 + $0x568] sm:$0xff]
    %v272 = vld [vmem:[#allocation4 + $0x570] sm:$0xff]
    %v273 = vld [vmem:[#allocation4 + $0x578] sm:$0xff]
    %v274 = vld [vmem:[#allocation4 + $0x580] sm:$0xff]
    %v275 = vld [vmem:[#allocation4 + $0x588] sm:$0xff]
    %v276 = vld [vmem:[#allocation4 + $0x590] sm:$0xff]
    %v277 = vld [vmem:[#allocation4 + $0x598] sm:$0xff]
    %v278 = vld [vmem:[#allocation4 + $0x5a0] sm:$0xff]
    %v279 = vld [vmem:[#allocation4 + $0x5a8] sm:$0xff]
    %v280 = vld [vmem:[#allocation4 + $0x5b0] sm:$0xff]
    %v281 = vld [vmem:[#allocation4 + $0x5b8] sm:$0xff]
    %v282 = vld [vmem:[#allocation4 + $0x5c0] sm:$0xff]
    %v283 = vld [vmem:[#allocation4 + $0x5c8] sm:$0xff]
    %v284 = vld [vmem:[#allocation4 + $0x5d0] sm:$0xff]
    %v285 = vld [vmem:[#allocation4 + $0x5d8] sm:$0xff]
    %v286 = vld [vmem:[#allocation4 + $0x5e0] sm:$0xff]
    %v287 = vld [vmem:[#allocation4 + $0x5e8] sm:$0xff]
    %v288 = vld [vmem:[#allocation4 + $0x5f0] sm:$0xff]
    %v289 = vld [vmem:[#allocation4 + $0x5f8] sm:$0xff]
    %v290 = vld [vmem:[%s2] sm:$0x3]
    %v292 = vlaneseq
    %v293 = vshrl.u32 %v292, 7
    %v294 = vsub.s32 0, %v293
    %v295 = vrot.slane %v290, %v294
    %v296 = vlaneseq
    %v297 = vshrl.u32 %v296, 7
    %v298 = vsub.s32 1, %v297
    %v299 = vrot.slane %v290, %v298
    %v494 = vunpack.c.l.b16 %v98
    %v495 = vunpack.c.h.b16 %v98
    %v496 = vunpack.c.l.b16 %v99
    %v497 = vunpack.c.h.b16 %v99
    %v498 = vunpack.c.l.b16 %v100
    %v499 = vunpack.c.h.b16 %v100
    %v500 = vunpack.c.l.b16 %v101
    %v501 = vunpack.c.h.b16 %v101
    %v502 = vunpack.c.l.b16 %v102
    %v503 = vunpack.c.h.b16 %v102
    %v504 = vunpack.c.l.b16 %v103
    %v505 = vunpack.c.h.b16 %v103
    %v506 = vunpack.c.l.b16 %v104
    %v507 = vunpack.c.h.b16 %v104
    %v508 = vunpack.c.l.b16 %v105
    %v509 = vunpack.c.h.b16 %v105
    %v510 = vunpack.c.l.b16 %v106
    %v511 = vunpack.c.h.b16 %v106
    %v512 = vunpack.c.l.b16 %v107
    %v513 = vunpack.c.h.b16 %v107
    %v514 = vunpack.c.l.b16 %v108
    %v515 = vunpack.c.h.b16 %v108
    %v516 = vunpack.c.l.b16 %v109
    %v517 = vunpack.c.h.b16 %v109
    %v518 = vunpack.c.l.b16 %v110
    %v519 = vunpack.c.h.b16 %v110
    %v520 = vunpack.c.l.b16 %v111
    %v521 = vunpack.c.h.b16 %v111
    %v522 = vunpack.c.l.b16 %v112
    %v523 = vunpack.c.h.b16 %v112
    %v524 = vunpack.c.l.b16 %v113
    %v525 = vunpack.c.h.b16 %v113
    %v526 = vunpack.c.l.b16 %v114
    %v527 = vunpack.c.h.b16 %v114
    %v528 = vunpack.c.l.b16 %v115
    %v529 = vunpack.c.h.b16 %v115
    %v530 = vunpack.c.l.b16 %v116
    %v531 = vunpack.c.h.b16 %v116
    %v532 = vunpack.c.l.b16 %v117
    %v533 = vunpack.c.h.b16 %v117
    %v534 = vunpack.c.l.b16 %v118
    %v535 = vunpack.c.h.b16 %v118
    %v536 = vunpack.c.l.b16 %v119
    %v537 = vunpack.c.h.b16 %v119
    %v538 = vunpack.c.l.b16 %v120
    %v539 = vunpack.c.h.b16 %v120
    %v540 = vunpack.c.l.b16 %v121
    %v541 = vunpack.c.h.b16 %v121
    %v542 = vunpack.c.l.b16 %v122
    %v543 = vunpack.c.h.b16 %v122
    %v544 = vunpack.c.l.b16 %v123
    %v545 = vunpack.c.h.b16 %v123
    %v546 = vunpack.c.l.b16 %v124
    %v547 = vunpack.c.h.b16 %v124
    %v548 = vunpack.c.l.b16 %v125
    %v549 = vunpack.c.h.b16 %v125
    %v550 = vunpack.c.l.b16 %v126
    %v551 = vunpack.c.h.b16 %v126
    %v552 = vunpack.c.l.b16 %v127
    %v553 = vunpack.c.h.b16 %v127
    %v554 = vunpack.c.l.b16 %v128
    %v555 = vunpack.c.h.b16 %v128
    %v556 = vunpack.c.l.b16 %v129
    %v557 = vunpack.c.h.b16 %v129
    %v558 = vunpack.c.l.b16 %v130
    %v559 = vunpack.c.h.b16 %v130
    %v560 = vunpack.c.l.b16 %v131
    %v561 = vunpack.c.h.b16 %v131
    %v562 = vunpack.c.l.b16 %v132
    %v563 = vunpack.c.h.b16 %v132
    %v564 = vunpack.c.l.b16 %v133
    %v565 = vunpack.c.h.b16 %v133
    %v566 = vunpack.c.l.b16 %v134
    %v567 = vunpack.c.h.b16 %v134
    %v568 = vunpack.c.l.b16 %v135
    %v569 = vunpack.c.h.b16 %v135
    %v570 = vunpack.c.l.b16 %v136
    %v571 = vunpack.c.h.b16 %v136
    %v572 = vunpack.c.l.b16 %v137
    %v573 = vunpack.c.h.b16 %v137
    %v574 = vunpack.c.l.b16 %v138
    %v575 = vunpack.c.h.b16 %v138
    %v576 = vunpack.c.l.b16 %v139
    %v577 = vunpack.c.h.b16 %v139
    %v578 = vunpack.c.l.b16 %v140
    %v579 = vunpack.c.h.b16 %v140
    %v580 = vunpack.c.l.b16 %v141
    %v581 = vunpack.c.h.b16 %v141
    %v582 = vunpack.c.l.b16 %v142
    %v583 = vunpack.c.h.b16 %v142
    %v584 = vunpack.c.l.b16 %v143
    %v585 = vunpack.c.h.b16 %v143
    %v586 = vunpack.c.l.b16 %v144
    %v587 = vunpack.c.h.b16 %v144
    %v588 = vunpack.c.l.b16 %v145
    %v589 = vunpack.c.h.b16 %v145
    %v590 = vunpack.c.l.b16 %v146
    %v591 = vunpack.c.h.b16 %v146
    %v592 = vunpack.c.l.b16 %v147
    %v593 = vunpack.c.h.b16 %v147
    %v594 = vunpack.c.l.b16 %v148
    %v595 = vunpack.c.h.b16 %v148
    %v596 = vunpack.c.l.b16 %v149
    %v597 = vunpack.c.h.b16 %v149
    %v598 = vunpack.c.l.b16 %v150
    %v599 = vunpack.c.h.b16 %v150
    %v600 = vunpack.c.l.b16 %v151
    %v601 = vunpack.c.h.b16 %v151
    %v602 = vunpack.c.l.b16 %v152
    %v603 = vunpack.c.h.b16 %v152
    %v604 = vunpack.c.l.b16 %v153
    %v605 = vunpack.c.h.b16 %v153
    %v606 = vunpack.c.l.b16 %v154
    %v607 = vunpack.c.h.b16 %v154
    %v608 = vunpack.c.l.b16 %v155
    %v609 = vunpack.c.h.b16 %v155
    %v610 = vunpack.c.l.b16 %v156
    %v611 = vunpack.c.h.b16 %v156
    %v612 = vunpack.c.l.b16 %v157
    %v613 = vunpack.c.h.b16 %v157
    %v614 = vunpack.c.l.b16 %v158
    %v615 = vunpack.c.h.b16 %v158
    %v616 = vunpack.c.l.b16 %v159
    %v617 = vunpack.c.h.b16 %v159
    %v618 = vunpack.c.l.b16 %v160
    %v619 = vunpack.c.h.b16 %v160
    %v620 = vunpack.c.l.b16 %v161
    %v621 = vunpack.c.h.b16 %v161
    %v622 = vunpack.c.l.b16 %v162
    %v623 = vunpack.c.h.b16 %v162
    %v624 = vunpack.c.l.b16 %v163
    %v625 = vunpack.c.h.b16 %v163
    %v626 = vunpack.c.l.b16 %v164
    %v627 = vunpack.c.h.b16 %v164
    %v628 = vunpack.c.l.b16 %v165
    %v629 = vunpack.c.h.b16 %v165
    %v630 = vunpack.c.l.b16 %v166
    %v631 = vunpack.c.h.b16 %v166
    %v632 = vunpack.c.l.b16 %v167
    %v633 = vunpack.c.h.b16 %v167
    %v634 = vunpack.c.l.b16 %v168
    %v635 = vunpack.c.h.b16 %v168
    %v636 = vunpack.c.l.b16 %v169
    %v637 = vunpack.c.h.b16 %v169
    %v638 = vunpack.c.l.b16 %v170
    %v639 = vunpack.c.h.b16 %v170
    %v640 = vunpack.c.l.b16 %v171
    %v641 = vunpack.c.h.b16 %v171
    %v642 = vunpack.c.l.b16 %v172
    %v643 = vunpack.c.h.b16 %v172
    %v644 = vunpack.c.l.b16 %v173
    %v645 = vunpack.c.h.b16 %v173
    %v646 = vunpack.c.l.b16 %v174
    %v647 = vunpack.c.h.b16 %v174
    %v648 = vunpack.c.l.b16 %v175
    %v649 = vunpack.c.h.b16 %v175
    %v650 = vunpack.c.l.b16 %v176
    %v651 = vunpack.c.h.b16 %v176
    %v652 = vunpack.c.l.b16 %v177
    %v653 = vunpack.c.h.b16 %v177
    %v654 = vunpack.c.l.b16 %v178
    %v655 = vunpack.c.h.b16 %v178
    %v656 = vunpack.c.l.b16 %v179
    %v657 = vunpack.c.h.b16 %v179
    %v658 = vunpack.c.l.b16 %v180
    %v659 = vunpack.c.h.b16 %v180
    %v660 = vunpack.c.l.b16 %v181
    %v661 = vunpack.c.h.b16 %v181
    %v662 = vunpack.c.l.b16 %v182
    %v663 = vunpack.c.h.b16 %v182
    %v664 = vunpack.c.l.b16 %v183
    %v665 = vunpack.c.h.b16 %v183
    %v666 = vunpack.c.l.b16 %v184
    %v667 = vunpack.c.h.b16 %v184
    %v668 = vunpack.c.l.b16 %v185
    %v669 = vunpack.c.h.b16 %v185
    %v670 = vunpack.c.l.b16 %v186
    %v671 = vunpack.c.h.b16 %v186
    %v672 = vunpack.c.l.b16 %v187
    %v673 = vunpack.c.h.b16 %v187
    %v674 = vunpack.c.l.b16 %v188
    %v675 = vunpack.c.h.b16 %v188
    %v676 = vunpack.c.l.b16 %v189
    %v677 = vunpack.c.h.b16 %v189
    %v678 = vunpack.c.l.b16 %v190
    %v679 = vunpack.c.h.b16 %v190
    %v680 = vunpack.c.l.b16 %v191
    %v681 = vunpack.c.h.b16 %v191
    %v682 = vunpack.c.l.b16 %v192
    %v683 = vunpack.c.h.b16 %v192
    %v684 = vunpack.c.l.b16 %v193
    %v685 = vunpack.c.h.b16 %v193
    %v686 = vunpack.c.l.b16 %v194
    %v687 = vunpack.c.h.b16 %v194
    %v688 = vunpack.c.l.b16 %v195
    %v689 = vunpack.c.h.b16 %v195
    %v690 = vunpack.c.l.b16 %v196
    %v691 = vunpack.c.h.b16 %v196
    %v692 = vunpack.c.l.b16 %v197
    %v693 = vunpack.c.h.b16 %v197
    %v694 = vunpack.c.l.b16 %v198
    %v695 = vunpack.c.h.b16 %v198
    %v696 = vunpack.c.l.b16 %v199
    %v697 = vunpack.c.h.b16 %v199
    %v698 = vunpack.c.l.b16 %v200
    %v699 = vunpack.c.h.b16 %v200
    %v700 = vunpack.c.l.b16 %v201
    %v701 = vunpack.c.h.b16 %v201
    %v702 = vunpack.c.l.b16 %v202
    %v703 = vunpack.c.h.b16 %v202
    %v704 = vunpack.c.l.b16 %v203
    %v705 = vunpack.c.h.b16 %v203
    %v706 = vunpack.c.l.b16 %v204
    %v707 = vunpack.c.h.b16 %v204
    %v708 = vunpack.c.l.b16 %v205
    %v709 = vunpack.c.h.b16 %v205
    %v710 = vunpack.c.l.b16 %v206
    %v711 = vunpack.c.h.b16 %v206
    %v712 = vunpack.c.l.b16 %v207
    %v713 = vunpack.c.h.b16 %v207
    %v714 = vunpack.c.l.b16 %v208
    %v715 = vunpack.c.h.b16 %v208
    %v716 = vunpack.c.l.b16 %v209
    %v717 = vunpack.c.h.b16 %v209
    %v718 = vunpack.c.l.b16 %v210
    %v719 = vunpack.c.h.b16 %v210
    %v720 = vunpack.c.l.b16 %v211
    %v721 = vunpack.c.h.b16 %v211
    %v722 = vunpack.c.l.b16 %v212
    %v723 = vunpack.c.h.b16 %v212
    %v724 = vunpack.c.l.b16 %v213
    %v725 = vunpack.c.h.b16 %v213
    %v726 = vunpack.c.l.b16 %v214
    %v727 = vunpack.c.h.b16 %v214
    %v728 = vunpack.c.l.b16 %v215
    %v729 = vunpack.c.h.b16 %v215
    %v730 = vunpack.c.l.b16 %v216
    %v731 = vunpack.c.h.b16 %v216
    %v732 = vunpack.c.l.b16 %v217
    %v733 = vunpack.c.h.b16 %v217
    %v734 = vunpack.c.l.b16 %v218
    %v735 = vunpack.c.h.b16 %v218
    %v736 = vunpack.c.l.b16 %v219
    %v737 = vunpack.c.h.b16 %v219
    %v738 = vunpack.c.l.b16 %v220
    %v739 = vunpack.c.h.b16 %v220
    %v740 = vunpack.c.l.b16 %v221
    %v741 = vunpack.c.h.b16 %v221
    %v742 = vunpack.c.l.b16 %v222
    %v743 = vunpack.c.h.b16 %v222
    %v744 = vunpack.c.l.b16 %v223
    %v745 = vunpack.c.h.b16 %v223
    %v746 = vunpack.c.l.b16 %v224
    %v747 = vunpack.c.h.b16 %v224
    %v748 = vunpack.c.l.b16 %v225
    %v749 = vunpack.c.h.b16 %v225
    %v750 = vunpack.c.l.b16 %v226
    %v751 = vunpack.c.h.b16 %v226
    %v752 = vunpack.c.l.b16 %v227
    %v753 = vunpack.c.h.b16 %v227
    %v754 = vunpack.c.l.b16 %v228
    %v755 = vunpack.c.h.b16 %v228
    %v756 = vunpack.c.l.b16 %v229
    %v757 = vunpack.c.h.b16 %v229
    %v758 = vunpack.c.l.b16 %v230
    %v759 = vunpack.c.h.b16 %v230
    %v760 = vunpack.c.l.b16 %v231
    %v761 = vunpack.c.h.b16 %v231
    %v762 = vunpack.c.l.b16 %v232
    %v763 = vunpack.c.h.b16 %v232
    %v764 = vunpack.c.l.b16 %v233
    %v765 = vunpack.c.h.b16 %v233
    %v766 = vunpack.c.l.b16 %v234
    %v767 = vunpack.c.h.b16 %v234
    %v768 = vunpack.c.l.b16 %v235
    %v769 = vunpack.c.h.b16 %v235
    %v770 = vunpack.c.l.b16 %v236
    %v771 = vunpack.c.h.b16 %v236
    %v772 = vunpack.c.l.b16 %v237
    %v773 = vunpack.c.h.b16 %v237
    %v774 = vunpack.c.l.b16 %v238
    %v775 = vunpack.c.h.b16 %v238
    %v776 = vunpack.c.l.b16 %v239
    %v777 = vunpack.c.h.b16 %v239
    %v778 = vunpack.c.l.b16 %v240
    %v779 = vunpack.c.h.b16 %v240
    %v780 = vunpack.c.l.b16 %v241
    %v781 = vunpack.c.h.b16 %v241
    %v782 = vunpack.c.l.b16 %v242
    %v783 = vunpack.c.h.b16 %v242
    %v784 = vunpack.c.l.b16 %v243
    %v785 = vunpack.c.h.b16 %v243
    %v786 = vunpack.c.l.b16 %v244
    %v787 = vunpack.c.h.b16 %v244
    %v788 = vunpack.c.l.b16 %v245
    %v789 = vunpack.c.h.b16 %v245
    %v790 = vunpack.c.l.b16 %v246
    %v791 = vunpack.c.h.b16 %v246
    %v792 = vunpack.c.l.b16 %v247
    %v793 = vunpack.c.h.b16 %v247
    %v794 = vunpack.c.l.b16 %v248
    %v795 = vunpack.c.h.b16 %v248
    %v796 = vunpack.c.l.b16 %v249
    %v797 = vunpack.c.h.b16 %v249
    %v798 = vunpack.c.l.b16 %v250
    %v799 = vunpack.c.h.b16 %v250
    %v800 = vunpack.c.l.b16 %v251
    %v801 = vunpack.c.h.b16 %v251
    %v802 = vunpack.c.l.b16 %v252
    %v803 = vunpack.c.h.b16 %v252
    %v804 = vunpack.c.l.b16 %v253
    %v805 = vunpack.c.h.b16 %v253
    %v806 = vunpack.c.l.b16 %v254
    %v807 = vunpack.c.h.b16 %v254
    %v808 = vunpack.c.l.b16 %v255
    %v809 = vunpack.c.h.b16 %v255
    %v810 = vunpack.c.l.b16 %v256
    %v811 = vunpack.c.h.b16 %v256
    %v812 = vunpack.c.l.b16 %v257
    %v813 = vunpack.c.h.b16 %v257
    %v814 = vunpack.c.l.b16 %v258
    %v815 = vunpack.c.h.b16 %v258
    %v816 = vunpack.c.l.b16 %v259
    %v817 = vunpack.c.h.b16 %v259
    %v818 = vunpack.c.l.b16 %v260
    %v819 = vunpack.c.h.b16 %v260
    %v820 = vunpack.c.l.b16 %v261
    %v821 = vunpack.c.h.b16 %v261
    %v822 = vunpack.c.l.b16 %v262
    %v823 = vunpack.c.h.b16 %v262
    %v824 = vunpack.c.l.b16 %v263
    %v825 = vunpack.c.h.b16 %v263
    %v826 = vunpack.c.l.b16 %v264
    %v827 = vunpack.c.h.b16 %v264
    %v828 = vunpack.c.l.b16 %v265
    %v829 = vunpack.c.h.b16 %v265
    %v830 = vunpack.c.l.b16 %v266
    %v831 = vunpack.c.h.b16 %v266
    %v832 = vunpack.c.l.b16 %v267
    %v833 = vunpack.c.h.b16 %v267
    %v834 = vunpack.c.l.b16 %v268
    %v835 = vunpack.c.h.b16 %v268
    %v836 = vunpack.c.l.b16 %v269
    %v837 = vunpack.c.h.b16 %v269
    %v838 = vunpack.c.l.b16 %v270
    %v839 = vunpack.c.h.b16 %v270
    %v840 = vunpack.c.l.b16 %v271
    %v841 = vunpack.c.h.b16 %v271
    %v842 = vunpack.c.l.b16 %v272
    %v843 = vunpack.c.h.b16 %v272
    %v844 = vunpack.c.l.b16 %v273
    %v845 = vunpack.c.h.b16 %v273
    %v846 = vunpack.c.l.b16 %v274
    %v847 = vunpack.c.h.b16 %v274
    %v848 = vunpack.c.l.b16 %v275
    %v849 = vunpack.c.h.b16 %v275
    %v850 = vunpack.c.l.b16 %v276
    %v851 = vunpack.c.h.b16 %v276
    %v852 = vunpack.c.l.b16 %v277
    %v853 = vunpack.c.h.b16 %v277
    %v854 = vunpack.c.l.b16 %v278
    %v855 = vunpack.c.h.b16 %v278
    %v856 = vunpack.c.l.b16 %v279
    %v857 = vunpack.c.h.b16 %v279
    %v858 = vunpack.c.l.b16 %v280
    %v859 = vunpack.c.h.b16 %v280
    %v860 = vunpack.c.l.b16 %v281
    %v861 = vunpack.c.h.b16 %v281
    %v862 = vunpack.c.l.b16 %v282
    %v863 = vunpack.c.h.b16 %v282
    %v864 = vunpack.c.l.b16 %v283
    %v865 = vunpack.c.h.b16 %v283
    %v866 = vunpack.c.l.b16 %v284
    %v867 = vunpack.c.h.b16 %v284
    %v868 = vunpack.c.l.b16 %v285
    %v869 = vunpack.c.h.b16 %v285
    %v870 = vunpack.c.l.b16 %v286
    %v871 = vunpack.c.h.b16 %v286
    %v872 = vunpack.c.l.b16 %v287
    %v873 = vunpack.c.h.b16 %v287
    %v874 = vunpack.c.l.b16 %v288
    %v875 = vunpack.c.h.b16 %v288
    %v876 = vunpack.c.l.b16 %v289
    %v877 = vunpack.c.h.b16 %v289
    %v878 = vpack.c.b16 %v496, %v494
    %v879 = vpack.c.b16 %v497, %v495
    %v880 = vpack.c.b16 %v500, %v498
    %v881 = vpack.c.b16 %v501, %v499
    %v882 = vpack.c.b16 %v504, %v502
    %v883 = vpack.c.b16 %v505, %v503
    %v884 = vpack.c.b16 %v508, %v506
    %v885 = vpack.c.b16 %v509, %v507
    %v886 = vpack.c.b16 %v512, %v510
    %v887 = vpack.c.b16 %v513, %v511
    %v888 = vpack.c.b16 %v516, %v514
    %v889 = vpack.c.b16 %v517, %v515
    %v890 = vpack.c.b16 %v520, %v518
    %v891 = vpack.c.b16 %v521, %v519
    %v892 = vpack.c.b16 %v524, %v522
    %v893 = vpack.c.b16 %v525, %v523
    %v894 = vpack.c.b16 %v528, %v526
    %v895 = vpack.c.b16 %v529, %v527
    %v896 = vpack.c.b16 %v532, %v530
    %v897 = vpack.c.b16 %v533, %v531
    %v898 = vpack.c.b16 %v536, %v534
    %v899 = vpack.c.b16 %v537, %v535
    %v900 = vpack.c.b16 %v540, %v538
    %v901 = vpack.c.b16 %v541, %v539
    %v902 = vpack.c.b16 %v544, %v542
    %v903 = vpack.c.b16 %v545, %v543
    %v904 = vpack.c.b16 %v548, %v546
    %v905 = vpack.c.b16 %v549, %v547
    %v906 = vpack.c.b16 %v552, %v550
    %v907 = vpack.c.b16 %v553, %v551
    %v908 = vpack.c.b16 %v556, %v554
    %v909 = vpack.c.b16 %v557, %v555
    %v910 = vpack.c.b16 %v560, %v558
    %v911 = vpack.c.b16 %v561, %v559
    %v912 = vpack.c.b16 %v564, %v562
    %v913 = vpack.c.b16 %v565, %v563
    %v914 = vpack.c.b16 %v568, %v566
    %v915 = vpack.c.b16 %v569, %v567
    %v916 = vpack.c.b16 %v572, %v570
    %v917 = vpack.c.b16 %v573, %v571
    %v918 = vpack.c.b16 %v576, %v574
    %v919 = vpack.c.b16 %v577, %v575
    %v920 = vpack.c.b16 %v580, %v578
    %v921 = vpack.c.b16 %v581, %v579
    %v922 = vpack.c.b16 %v584, %v582
    %v923 = vpack.c.b16 %v585, %v583
    %v924 = vpack.c.b16 %v588, %v586
    %v925 = vpack.c.b16 %v589, %v587
    %v926 = vpack.c.b16 %v592, %v590
    %v927 = vpack.c.b16 %v593, %v591
    %v928 = vpack.c.b16 %v596, %v594
    %v929 = vpack.c.b16 %v597, %v595
    %v930 = vpack.c.b16 %v600, %v598
    %v931 = vpack.c.b16 %v601, %v599
    %v932 = vpack.c.b16 %v604, %v602
    %v933 = vpack.c.b16 %v605, %v603
    %v934 = vpack.c.b16 %v608, %v606
    %v935 = vpack.c.b16 %v609, %v607
    %v936 = vpack.c.b16 %v612, %v610
    %v937 = vpack.c.b16 %v613, %v611
    %v938 = vpack.c.b16 %v616, %v614
    %v939 = vpack.c.b16 %v617, %v615
    %v940 = vpack.c.b16 %v620, %v618
    %v941 = vpack.c.b16 %v621, %v619
    %v942 = vpack.c.b16 %v624, %v622
    %v943 = vpack.c.b16 %v625, %v623
    %v944 = vpack.c.b16 %v628, %v626
    %v945 = vpack.c.b16 %v629, %v627
    %v946 = vpack.c.b16 %v632, %v630
    %v947 = vpack.c.b16 %v633, %v631
    %v948 = vpack.c.b16 %v636, %v634
    %v949 = vpack.c.b16 %v637, %v635
    %v950 = vpack.c.b16 %v640, %v638
    %v951 = vpack.c.b16 %v641, %v639
    %v952 = vpack.c.b16 %v644, %v642
    %v953 = vpack.c.b16 %v645, %v643
    %v954 = vpack.c.b16 %v648, %v646
    %v955 = vpack.c.b16 %v649, %v647
    %v956 = vpack.c.b16 %v652, %v650
    %v957 = vpack.c.b16 %v653, %v651
    %v958 = vpack.c.b16 %v656, %v654
    %v959 = vpack.c.b16 %v657, %v655
    %v960 = vpack.c.b16 %v660, %v658
    %v961 = vpack.c.b16 %v661, %v659
    %v962 = vpack.c.b16 %v664, %v662
    %v963 = vpack.c.b16 %v665, %v663
    %v964 = vpack.c.b16 %v668, %v666
    %v965 = vpack.c.b16 %v669, %v667
    %v966 = vpack.c.b16 %v672, %v670
    %v967 = vpack.c.b16 %v673, %v671
    %v968 = vpack.c.b16 %v676, %v674
    %v969 = vpack.c.b16 %v677, %v675
    %v970 = vpack.c.b16 %v680, %v678
    %v971 = vpack.c.b16 %v681, %v679
    %v972 = vpack.c.b16 %v684, %v682
    %v973 = vpack.c.b16 %v685, %v683
    %v974 = vpack.c.b16 %v688, %v686
    %v975 = vpack.c.b16 %v689, %v687
    %v976 = vpack.c.b16 %v692, %v690
    %v977 = vpack.c.b16 %v693, %v691
    %v978 = vpack.c.b16 %v696, %v694
    %v979 = vpack.c.b16 %v697, %v695
    %v980 = vpack.c.b16 %v700, %v698
    %v981 = vpack.c.b16 %v701, %v699
    %v982 = vpack.c.b16 %v704, %v702
    %v983 = vpack.c.b16 %v705, %v703
    %v984 = vpack.c.b16 %v708, %v706
    %v985 = vpack.c.b16 %v709, %v707
    %v986 = vpack.c.b16 %v712, %v710
    %v987 = vpack.c.b16 %v713, %v711
    %v988 = vpack.c.b16 %v716, %v714
    %v989 = vpack.c.b16 %v717, %v715
    %v990 = vpack.c.b16 %v720, %v718
    %v991 = vpack.c.b16 %v721, %v719
    %v992 = vpack.c.b16 %v724, %v722
    %v993 = vpack.c.b16 %v725, %v723
    %v994 = vpack.c.b16 %v728, %v726
    %v995 = vpack.c.b16 %v729, %v727
    %v996 = vpack.c.b16 %v732, %v730
    %v997 = vpack.c.b16 %v733, %v731
    %v998 = vpack.c.b16 %v736, %v734
    %v999 = vpack.c.b16 %v737, %v735
    %v1000 = vpack.c.b16 %v740, %v738
    %v1001 = vpack.c.b16 %v741, %v739
    %v1002 = vpack.c.b16 %v744, %v742
    %v1003 = vpack.c.b16 %v745, %v743
    %v1004 = vpack.c.b16 %v748, %v746
    %v1005 = vpack.c.b16 %v749, %v747
    %v1006 = vpack.c.b16 %v752, %v750
    %v1007 = vpack.c.b16 %v753, %v751
    %v1008 = vpack.c.b16 %v756, %v754
    %v1009 = vpack.c.b16 %v757, %v755
    %v1010 = vpack.c.b16 %v760, %v758
    %v1011 = vpack.c.b16 %v761, %v759
    %v1012 = vpack.c.b16 %v764, %v762
    %v1013 = vpack.c.b16 %v765, %v763
    %v1014 = vpack.c.b16 %v768, %v766
    %v1015 = vpack.c.b16 %v769, %v767
    %v1016 = vpack.c.b16 %v772, %v770
    %v1017 = vpack.c.b16 %v773, %v771
    %v1018 = vpack.c.b16 %v776, %v774
    %v1019 = vpack.c.b16 %v777, %v775
    %v1020 = vpack.c.b16 %v780, %v778
    %v1021 = vpack.c.b16 %v781, %v779
    %v1022 = vpack.c.b16 %v784, %v782
    %v1023 = vpack.c.b16 %v785, %v783
    %v1024 = vpack.c.b16 %v788, %v786
    %v1025 = vpack.c.b16 %v789, %v787
    %v1026 = vpack.c.b16 %v792, %v790
    %v1027 = vpack.c.b16 %v793, %v791
    %v1028 = vpack.c.b16 %v796, %v794
    %v1029 = vpack.c.b16 %v797, %v795
    %v1030 = vpack.c.b16 %v800, %v798
    %v1031 = vpack.c.b16 %v801, %v799
    %v1032 = vpack.c.b16 %v804, %v802
    %v1033 = vpack.c.b16 %v805, %v803
    %v1034 = vpack.c.b16 %v808, %v806
    %v1035 = vpack.c.b16 %v809, %v807
    %v1036 = vpack.c.b16 %v812, %v810
    %v1037 = vpack.c.b16 %v813, %v811
    %v1038 = vpack.c.b16 %v816, %v814
    %v1039 = vpack.c.b16 %v817, %v815
    %v1040 = vpack.c.b16 %v820, %v818
    %v1041 = vpack.c.b16 %v821, %v819
    %v1042 = vpack.c.b16 %v824, %v822
    %v1043 = vpack.c.b16 %v825, %v823
    %v1044 = vpack.c.b16 %v828, %v826
    %v1045 = vpack.c.b16 %v829, %v827
    %v1046 = vpack.c.b16 %v832, %v830
    %v1047 = vpack.c.b16 %v833, %v831
    %v1048 = vpack.c.b16 %v836, %v834
    %v1049 = vpack.c.b16 %v837, %v835
    %v1050 = vpack.c.b16 %v840, %v838
    %v1051 = vpack.c.b16 %v841, %v839
    %v1052 = vpack.c.b16 %v844, %v842
    %v1053 = vpack.c.b16 %v845, %v843
    %v1054 = vpack.c.b16 %v848, %v846
    %v1055 = vpack.c.b16 %v849, %v847
    %v1056 = vpack.c.b16 %v852, %v850
    %v1057 = vpack.c.b16 %v853, %v851
    %v1058 = vpack.c.b16 %v856, %v854
    %v1059 = vpack.c.b16 %v857, %v855
    %v1060 = vpack.c.b16 %v860, %v858
    %v1061 = vpack.c.b16 %v861, %v859
    %v1062 = vpack.c.b16 %v864, %v862
    %v1063 = vpack.c.b16 %v865, %v863
    %v1064 = vpack.c.b16 %v868, %v866
    %v1065 = vpack.c.b16 %v869, %v867
    %v1066 = vpack.c.b16 %v872, %v870
    %v1067 = vpack.c.b16 %v873, %v871
    %v1068 = vpack.c.b16 %v876, %v874
    %v1069 = vpack.c.b16 %v877, %v875
    %1262 = vmatprep.subr.bf16.mxu0 %v893
    %1263 = vmatpush1.bf16.msra.mxu0 %v892
    %1264 = vmatprep.subr.bf16.mxu0 %v891
    %1265 = vmatpush1.bf16.msra.mxu0 %v890
    %1266 = vmatprep.subr.bf16.mxu0 %v889
    %1267 = vmatpush1.bf16.msra.mxu0 %v888
    %1268 = vmatprep.subr.bf16.mxu0 %v887
    %1269 = vmatpush1.bf16.msra.mxu0 %v886
    %1270 = vmatprep.subr.bf16.mxu0 %v885
    %1271 = vmatpush1.bf16.msra.mxu0 %v884
    %1272 = vmatprep.subr.bf16.mxu0 %v883
    %1273 = vmatpush1.bf16.msra.mxu0 %v882
    %1274 = vmatprep.subr.bf16.mxu0 %v881
    %1275 = vmatpush1.bf16.msra.mxu0 %v880
    %1276 = vmatprep.subr.bf16.mxu0 %v879
    %1277 = vmatpush1.bf16.msra.mxu0 %v878
    %1278 = vmatprep.subr.bf16.mxu0 %v909
    %1279 = vmatpush2.bf16.msra.mxu0 %v908
    %1280 = vmatprep.subr.bf16.mxu0 %v907
    %1281 = vmatpush2.bf16.msra.mxu0 %v906
    %1282 = vmatprep.subr.bf16.mxu0 %v905
    %1283 = vmatpush2.bf16.msra.mxu0 %v904
    %1284 = vmatprep.subr.bf16.mxu0 %v903
    %1285 = vmatpush2.bf16.msra.mxu0 %v902
    %1286 = vmatprep.subr.bf16.mxu0 %v901
    %1287 = vmatpush2.bf16.msra.mxu0 %v900
    %1288 = vmatprep.subr.bf16.mxu0 %v899
    %1289 = vmatpush2.bf16.msra.mxu0 %v898
    %1290 = vmatprep.subr.bf16.mxu0 %v897
    %1291 = vmatpush2.bf16.msra.mxu0 %v896
    %1292 = vmatprep.subr.bf16.mxu0 %v895
    %1293 = vmatpush2.bf16.msra.mxu0 %v894
    %1294 = vmatprep.mubr.bf16.mxu0 %v87
    %1295 = vmatmul.mubr.bf16.gmra.mxu0 %v86
    %v1296 = vpop.f32.mrf.mxu0
    %v1297 = vadd.f32 %v295, %v1296
    %v1298 = vpop.f32.mrf.mxu0
    %v1299 = vadd.f32 %v299, %v1298
    %v1300 = vpop.f32.mrf.mxu0
    %v1301 = vadd.f32 %v295, %v1300
    %v1302 = vpop.f32.mrf.mxu0
    %v1303 = vadd.f32 %v299, %v1302
    %1304 = vdwg.mxu0
    %1305 = vmatprep.subr.bf16.mxu0 %v925
    %1306 = vmatpush1.bf16.msra.mxu0 %v924
    %1307 = vmatprep.subr.bf16.mxu0 %v923
    %1308 = vmatpush1.bf16.msra.mxu0 %v922
    %1309 = vmatprep.subr.bf16.mxu0 %v921
    %1310 = vmatpush1.bf16.msra.mxu0 %v920
    %1311 = vmatprep.subr.bf16.mxu0 %v919
    %1312 = vmatpush1.bf16.msra.mxu0 %v918
    %1313 = vmatprep.subr.bf16.mxu0 %v917
    %1314 = vmatpush1.bf16.msra.mxu0 %v916
    %1315 = vmatprep.subr.bf16.mxu0 %v915
    %1316 = vmatpush1.bf16.msra.mxu0 %v914
    %1317 = vmatprep.subr.bf16.mxu0 %v913
    %1318 = vmatpush1.bf16.msra.mxu0 %v912
    %1319 = vmatprep.subr.bf16.mxu0 %v911
    %1320 = vmatpush1.bf16.msra.mxu0 %v910
    %1321 = vmatprep.subr.bf16.mxu0 %v941
    %1322 = vmatpush2.bf16.msra.mxu0 %v940
    %1323 = vmatprep.subr.bf16.mxu0 %v939
    %1324 = vmatpush2.bf16.msra.mxu0 %v938
    %1325 = vmatprep.subr.bf16.mxu0 %v937
    %1326 = vmatpush2.bf16.msra.mxu0 %v936
    %1327 = vmatprep.subr.bf16.mxu0 %v935
    %1328 = vmatpush2.bf16.msra.mxu0 %v934
    %1329 = vmatprep.subr.bf16.mxu0 %v933
    %1330 = vmatpush2.bf16.msra.mxu0 %v932
    %1331 = vmatprep.subr.bf16.mxu0 %v931
    %1332 = vmatpush2.bf16.msra.mxu0 %v930
    %1333 = vmatprep.subr.bf16.mxu0 %v929
    %1334 = vmatpush2.bf16.msra.mxu0 %v928
    %1335 = vmatprep.subr.bf16.mxu0 %v927
    %1336 = vmatpush2.bf16.msra.mxu0 %v926
    %1337 = vmatprep.mubr.bf16.mxu0 %v89
    %1338 = vmatmul.mubr.bf16.gmra.mxu0 %v88
    %v1339 = vpop.f32.mrf.mxu0
    %v1340 = vadd.f32 %v1297, %v1339
    %v1341 = vpop.f32.mrf.mxu0
    %v1342 = vadd.f32 %v1299, %v1341
    %v1343 = vpop.f32.mrf.mxu0
    %v1344 = vadd.f32 %v1301, %v1343
    %v1345 = vpop.f32.mrf.mxu0
    %v1346 = vadd.f32 %v1303, %v1345
    %1347 = vdwg.mxu0
    %1348 = vmatprep.subr.bf16.mxu0 %v957
    %1349 = vmatpush1.bf16.msra.mxu0 %v956
    %1350 = vmatprep.subr.bf16.mxu0 %v955
    %1351 = vmatpush1.bf16.msra.mxu0 %v954
    %1352 = vmatprep.subr.bf16.mxu0 %v953
    %1353 = vmatpush1.bf16.msra.mxu0 %v952
    %1354 = vmatprep.subr.bf16.mxu0 %v951
    %1355 = vmatpush1.bf16.msra.mxu0 %v950
    %1356 = vmatprep.subr.bf16.mxu0 %v949
    %1357 = vmatpush1.bf16.msra.mxu0 %v948
    %1358 = vmatprep.subr.bf16.mxu0 %v947
    %1359 = vmatpush1.bf16.msra.mxu0 %v946
    %1360 = vmatprep.subr.bf16.mxu0 %v945
    %1361 = vmatpush1.bf16.msra.mxu0 %v944
    %1362 = vmatprep.subr.bf16.mxu0 %v943
    %1363 = vmatpush1.bf16.msra.mxu0 %v942
    %1364 = vmatprep.subr.bf16.mxu0 %v973
    %1365 = vmatpush2.bf16.msra.mxu0 %v972
    %1366 = vmatprep.subr.bf16.mxu0 %v971
    %1367 = vmatpush2.bf16.msra.mxu0 %v970
    %1368 = vmatprep.subr.bf16.mxu0 %v969
    %1369 = vmatpush2.bf16.msra.mxu0 %v968
    %1370 = vmatprep.subr.bf16.mxu0 %v967
    %1371 = vmatpush2.bf16.msra.mxu0 %v966
    %1372 = vmatprep.subr.bf16.mxu0 %v965
    %1373 = vmatpush2.bf16.msra.mxu0 %v964
    %1374 = vmatprep.subr.bf16.mxu0 %v963
    %1375 = vmatpush2.bf16.msra.mxu0 %v962
    %1376 = vmatprep.subr.bf16.mxu0 %v961
    %1377 = vmatpush2.bf16.msra.mxu0 %v960
    %1378 = vmatprep.subr.bf16.mxu0 %v959
    %1379 = vmatpush2.bf16.msra.mxu0 %v958
    %1380 = vmatprep.mubr.bf16.mxu0 %v91
    %1381 = vmatmul.mubr.bf16.gmra.mxu0 %v90
    %v1382 = vpop.f32.mrf.mxu0
    %v1383 = vadd.f32 %v1340, %v1382
    %v1384 = vpop.f32.mrf.mxu0
    %v1385 = vadd.f32 %v1342, %v1384
    %v1386 = vpop.f32.mrf.mxu0
    %v1387 = vadd.f32 %v1344, %v1386
    %v1388 = vpop.f32.mrf.mxu0
    %v1389 = vadd.f32 %v1346, %v1388
    %1390 = vdwg.mxu0
    %1391 = vmatprep.subr.bf16.mxu0 %v989
    %1392 = vmatpush1.bf16.msra.mxu0 %v988
    %1393 = vmatprep.subr.bf16.mxu0 %v987
    %1394 = vmatpush1.bf16.msra.mxu0 %v986
    %1395 = vmatprep.subr.bf16.mxu0 %v985
    %1396 = vmatpush1.bf16.msra.mxu0 %v984
    %1397 = vmatprep.subr.bf16.mxu0 %v983
    %1398 = vmatpush1.bf16.msra.mxu0 %v982
    %1399 = vmatprep.subr.bf16.mxu0 %v981
    %1400 = vmatpush1.bf16.msra.mxu0 %v980
    %1401 = vmatprep.subr.bf16.mxu0 %v979
    %1402 = vmatpush1.bf16.msra.mxu0 %v978
    %1403 = vmatprep.subr.bf16.mxu0 %v977
    %1404 = vmatpush1.bf16.msra.mxu0 %v976
    %1405 = vmatprep.subr.bf16.mxu0 %v975
    %1406 = vmatpush1.bf16.msra.mxu0 %v974
    %1407 = vmatprep.subr.bf16.mxu0 %v1005
    %1408 = vmatpush2.bf16.msra.mxu0 %v1004
    %1409 = vmatprep.subr.bf16.mxu0 %v1003
    %1410 = vmatpush2.bf16.msra.mxu0 %v1002
    %1411 = vmatprep.subr.bf16.mxu0 %v1001
    %1412 = vmatpush2.bf16.msra.mxu0 %v1000
    %1413 = vmatprep.subr.bf16.mxu0 %v999
    %1414 = vmatpush2.bf16.msra.mxu0 %v998
    %1415 = vmatprep.subr.bf16.mxu0 %v997
    %1416 = vmatpush2.bf16.msra.mxu0 %v996
    %1417 = vmatprep.subr.bf16.mxu0 %v995
    %1418 = vmatpush2.bf16.msra.mxu0 %v994
    %1419 = vmatprep.subr.bf16.mxu0 %v993
    %1420 = vmatpush2.bf16.msra.mxu0 %v992
    %1421 = vmatprep.subr.bf16.mxu0 %v991
    %1422 = vmatpush2.bf16.msra.mxu0 %v990
    %1423 = vmatprep.mubr.bf16.mxu0 %v93
    %1424 = vmatmul.mubr.bf16.gmra.mxu0 %v92
    %v1425 = vpop.f32.mrf.mxu0
    %v1426 = vadd.f32 %v1383, %v1425
    %v1427 = vpop.f32.mrf.mxu0
    %v1428 = vadd.f32 %v1385, %v1427
    %v1429 = vpop.f32.mrf.mxu0
    %v1430 = vadd.f32 %v1387, %v1429
    %v1431 = vpop.f32.mrf.mxu0
    %v1432 = vadd.f32 %v1389, %v1431
    %1433 = vdwg.mxu0
    %1434 = vmatprep.subr.bf16.mxu0 %v1021
    %1435 = vmatpush1.bf16.msra.mxu0 %v1020
    %1436 = vmatprep.subr.bf16.mxu0 %v1019
    %1437 = vmatpush1.bf16.msra.mxu0 %v1018
    %1438 = vmatprep.subr.bf16.mxu0 %v1017
    %1439 = vmatpush1.bf16.msra.mxu0 %v1016
    %1440 = vmatprep.subr.bf16.mxu0 %v1015
    %1441 = vmatpush1.bf16.msra.mxu0 %v1014
    %1442 = vmatprep.subr.bf16.mxu0 %v1013
    %1443 = vmatpush1.bf16.msra.mxu0 %v1012
    %1444 = vmatprep.subr.bf16.mxu0 %v1011
    %1445 = vmatpush1.bf16.msra.mxu0 %v1010
    %1446 = vmatprep.subr.bf16.mxu0 %v1009
    %1447 = vmatpush1.bf16.msra.mxu0 %v1008
    %1448 = vmatprep.subr.bf16.mxu0 %v1007
    %1449 = vmatpush1.bf16.msra.mxu0 %v1006
    %1450 = vmatprep.subr.bf16.mxu0 %v1037
    %1451 = vmatpush2.bf16.msra.mxu0 %v1036
    %1452 = vmatprep.subr.bf16.mxu0 %v1035
    %1453 = vmatpush2.bf16.msra.mxu0 %v1034
    %1454 = vmatprep.subr.bf16.mxu0 %v1033
    %1455 = vmatpush2.bf16.msra.mxu0 %v1032
    %1456 = vmatprep.subr.bf16.mxu0 %v1031
    %1457 = vmatpush2.bf16.msra.mxu0 %v1030
    %1458 = vmatprep.subr.bf16.mxu0 %v1029
    %1459 = vmatpush2.bf16.msra.mxu0 %v1028
    %1460 = vmatprep.subr.bf16.mxu0 %v1027
    %1461 = vmatpush2.bf16.msra.mxu0 %v1026
    %1462 = vmatprep.subr.bf16.mxu0 %v1025
    %1463 = vmatpush2.bf16.msra.mxu0 %v1024
    %1464 = vmatprep.subr.bf16.mxu0 %v1023
    %1465 = vmatpush2.bf16.msra.mxu0 %v1022
    %1466 = vmatprep.mubr.bf16.mxu0 %v95
    %1467 = vmatmul.mubr.bf16.gmra.mxu0 %v94
    %v1468 = vpop.f32.mrf.mxu0
    %v1469 = vadd.f32 %v1426, %v1468
    %v1470 = vpop.f32.mrf.mxu0
    %v1471 = vadd.f32 %v1428, %v1470
    %v1472 = vpop.f32.mrf.mxu0
    %v1473 = vadd.f32 %v1430, %v1472
    %v1474 = vpop.f32.mrf.mxu0
    %v1475 = vadd.f32 %v1432, %v1474
    %1476 = vdwg.mxu0
    %1477 = vmatprep.subr.bf16.mxu0 %v1053
    %1478 = vmatpush1.bf16.msra.mxu0 %v1052
    %1479 = vmatprep.subr.bf16.mxu0 %v1051
    %1480 = vmatpush1.bf16.msra.mxu0 %v1050
    %1481 = vmatprep.subr.bf16.mxu0 %v1049
    %1482 = vmatpush1.bf16.msra.mxu0 %v1048
    %1483 = vmatprep.subr.bf16.mxu0 %v1047
    %1484 = vmatpush1.bf16.msra.mxu0 %v1046
    %1485 = vmatprep.subr.bf16.mxu0 %v1045
    %1486 = vmatpush1.bf16.msra.mxu0 %v1044
    %1487 = vmatprep.subr.bf16.mxu0 %v1043
    %1488 = vmatpush1.bf16.msra.mxu0 %v1042
    %1489 = vmatprep.subr.bf16.mxu0 %v1041
    %1490 = vmatpush1.bf16.msra.mxu0 %v1040
    %1491 = vmatprep.subr.bf16.mxu0 %v1039
    %1492 = vmatpush1.bf16.msra.mxu0 %v1038
    %1493 = vmatprep.subr.bf16.mxu0 %v1069
    %1494 = vmatpush2.bf16.msra.mxu0 %v1068
    %1495 = vmatprep.subr.bf16.mxu0 %v1067
    %1496 = vmatpush2.bf16.msra.mxu0 %v1066
    %1497 = vmatprep.subr.bf16.mxu0 %v1065
    %1498 = vmatpush2.bf16.msra.mxu0 %v1064
    %1499 = vmatprep.subr.bf16.mxu0 %v1063
    %1500 = vmatpush2.bf16.msra.mxu0 %v1062
    %1501 = vmatprep.subr.bf16.mxu0 %v1061
    %1502 = vmatpush2.bf16.msra.mxu0 %v1060
    %1503 = vmatprep.subr.bf16.mxu0 %v1059
    %1504 = vmatpush2.bf16.msra.mxu0 %v1058
    %1505 = vmatprep.subr.bf16.mxu0 %v1057
    %1506 = vmatpush2.bf16.msra.mxu0 %v1056
    %1507 = vmatprep.subr.bf16.mxu0 %v1055
    %1508 = vmatpush2.bf16.msra.mxu0 %v1054
    %1509 = vmatprep.mubr.bf16.mxu0 %v97
    %1510 = vmatmul.mubr.bf16.gmra.mxu0 %v96
    %v1511 = vpop.f32.mrf.mxu0
    %v1512 = vadd.f32 %v1469, %v1511
    %v1513 = vpop.f32.mrf.mxu0
    %v1514 = vadd.f32 %v1471, %v1513
    %v1515 = vpop.f32.mrf.mxu0
    %v1516 = vadd.f32 %v1473, %v1515
    %v1517 = vpop.f32.mrf.mxu0
    %v1518 = vadd.f32 %v1475, %v1517
    %1519 = vdwg.mxu0
    %v1520 = vmax.f32 %v1512, 0.0
    %v1521 = vmax.f32 %v1514, 0.0
    %v1522 = vmax.f32 %v1516, 0.0
    %v1523 = vmax.f32 %v1518, 0.0
    %v1524 = vpack.c.bf16 %v1522, %v1520
    %v1525 = vpack.c.bf16 %v1523, %v1521
    %v1526 = vld [vmem:[#allocation6] sm:$0xf]
    %v1527 = vld [vmem:[#allocation6 + $0x4] sm:$0xf]
    %v1528 = vld [vmem:[#allocation6 + $0x8] sm:$0xf]
    %v1529 = vld [vmem:[#allocation6 + $0xc] sm:$0xf]
    %v1530 = vld [vmem:[#allocation6 + $0x10] sm:$0xf]
    %v1531 = vld [vmem:[#allocation6 + $0x14] sm:$0xf]
    %v1532 = vld [vmem:[#allocation6 + $0x18] sm:$0xf]
    %v1533 = vld [vmem:[#allocation6 + $0x1c] sm:$0xf]
    %v1534 = vld [vmem:[#allocation6 + $0x20] sm:$0xf]
    %v1535 = vld [vmem:[#allocation6 + $0x24] sm:$0xf]
    %v1536 = vld [vmem:[#allocation6 + $0x28] sm:$0xf]
    %v1537 = vld [vmem:[#allocation6 + $0x2c] sm:$0xf]
    %v1538 = vld [vmem:[#allocation6 + $0x30] sm:$0xf]
    %v1539 = vld [vmem:[#allocation6 + $0x34] sm:$0xf]
    %v1540 = vld [vmem:[#allocation6 + $0x38] sm:$0xf]
    %v1541 = vld [vmem:[#allocation6 + $0x3c] sm:$0xf]
    %v1542 = vld [vmem:[#allocation6 + $0x40] sm:$0xf]
    %v1543 = vld [vmem:[#allocation6 + $0x44] sm:$0xf]
    %v1544 = vld [vmem:[#allocation6 + $0x48] sm:$0xf]
    %v1545 = vld [vmem:[#allocation6 + $0x4c] sm:$0xf]
    %v1546 = vld [vmem:[#allocation6 + $0x50] sm:$0xf]
    %v1547 = vld [vmem:[#allocation6 + $0x54] sm:$0xf]
    %v1548 = vld [vmem:[#allocation6 + $0x58] sm:$0xf]
    %v1549 = vld [vmem:[#allocation6 + $0x5c] sm:$0xf]
    %v1550 = vld [vmem:[#allocation6 + $0x60] sm:$0xf]
    %v1551 = vld [vmem:[#allocation6 + $0x64] sm:$0xf]
    %v1552 = vld [vmem:[#allocation6 + $0x68] sm:$0xf]
    %v1553 = vld [vmem:[#allocation6 + $0x6c] sm:$0xf]
    %v1554 = vld [vmem:[#allocation6 + $0x70] sm:$0xf]
    %v1555 = vld [vmem:[#allocation6 + $0x74] sm:$0xf]
    %v1556 = vld [vmem:[#allocation6 + $0x78] sm:$0xf]
    %v1557 = vld [vmem:[#allocation6 + $0x7c] sm:$0xf]
    %v1558 = vld [vmem:[%s4] sm:$0x1]
    %v1560 = vlaneseq
    %v1561 = vshrl.u32 %v1560, 7
    %v1562 = vsub.s32 0, %v1561
    %v1563 = vrot.slane %v1558, %v1562
    %v1597 = vunpack.c.l.b16 %v1526
    %v1598 = vunpack.c.l.b16 %v1527
    %v1599 = vunpack.c.l.b16 %v1528
    %v1600 = vunpack.c.l.b16 %v1529
    %v1601 = vunpack.c.l.b16 %v1530
    %v1602 = vunpack.c.l.b16 %v1531
    %v1603 = vunpack.c.l.b16 %v1532
    %v1604 = vunpack.c.l.b16 %v1533
    %v1605 = vunpack.c.l.b16 %v1534
    %v1606 = vunpack.c.l.b16 %v1535
    %v1607 = vunpack.c.l.b16 %v1536
    %v1608 = vunpack.c.l.b16 %v1537
    %v1609 = vunpack.c.l.b16 %v1538
    %v1610 = vunpack.c.l.b16 %v1539
    %v1611 = vunpack.c.l.b16 %v1540
    %v1612 = vunpack.c.l.b16 %v1541
    %v1613 = vunpack.c.l.b16 %v1542
    %v1614 = vunpack.c.l.b16 %v1543
    %v1615 = vunpack.c.l.b16 %v1544
    %v1616 = vunpack.c.l.b16 %v1545
    %v1617 = vunpack.c.l.b16 %v1546
    %v1618 = vunpack.c.l.b16 %v1547
    %v1619 = vunpack.c.l.b16 %v1548
    %v1620 = vunpack.c.l.b16 %v1549
    %v1621 = vunpack.c.l.b16 %v1550
    %v1622 = vunpack.c.l.b16 %v1551
    %v1623 = vunpack.c.l.b16 %v1552
    %v1624 = vunpack.c.l.b16 %v1553
    %v1625 = vunpack.c.l.b16 %v1554
    %v1626 = vunpack.c.l.b16 %v1555
    %v1627 = vunpack.c.l.b16 %v1556
    %v1628 = vunpack.c.l.b16 %v1557
    %v1629 = vpack.c.b16 %v1598, %v1597
    %v1630 = vpack.c.b16 %v1600, %v1599
    %v1631 = vpack.c.b16 %v1602, %v1601
    %v1632 = vpack.c.b16 %v1604, %v1603
    %v1633 = vpack.c.b16 %v1606, %v1605
    %v1634 = vpack.c.b16 %v1608, %v1607
    %v1635 = vpack.c.b16 %v1610, %v1609
    %v1636 = vpack.c.b16 %v1612, %v1611
    %v1637 = vpack.c.b16 %v1614, %v1613
    %v1638 = vpack.c.b16 %v1616, %v1615
    %v1639 = vpack.c.b16 %v1618, %v1617
    %v1640 = vpack.c.b16 %v1620, %v1619
    %v1641 = vpack.c.b16 %v1622, %v1621
    %v1642 = vpack.c.b16 %v1624, %v1623
    %v1643 = vpack.c.b16 %v1626, %v1625
    %v1644 = vpack.c.b16 %v1628, %v1627
    %1661 = vmatprep.subr.bf16.mxu0 0
    %1662 = vmatpush1.bf16.msra.mxu0 %v1636
    %1663 = vmatprep.subr.bf16.mxu0 0
    %1664 = vmatpush1.bf16.msra.mxu0 %v1635
    %1665 = vmatprep.subr.bf16.mxu0 0
    %1666 = vmatpush1.bf16.msra.mxu0 %v1634
    %1667 = vmatprep.subr.bf16.mxu0 0
    %1668 = vmatpush1.bf16.msra.mxu0 %v1633
    %1669 = vmatprep.subr.bf16.mxu0 0
    %1670 = vmatpush1.bf16.msra.mxu0 %v1632
    %1671 = vmatprep.subr.bf16.mxu0 0
    %1672 = vmatpush1.bf16.msra.mxu0 %v1631
    %1673 = vmatprep.subr.bf16.mxu0 0
    %1674 = vmatpush1.bf16.msra.mxu0 %v1630
    %1675 = vmatprep.subr.bf16.mxu0 0
    %1676 = vmatpush1.bf16.msra.mxu0 %v1629
    %1677 = vmatprep.subr.bf16.mxu0 0
    %1678 = vmatpush2.bf16.msra.mxu0 %v1644
    %1679 = vmatprep.subr.bf16.mxu0 0
    %1680 = vmatpush2.bf16.msra.mxu0 %v1643
    %1681 = vmatprep.subr.bf16.mxu0 0
    %1682 = vmatpush2.bf16.msra.mxu0 %v1642
    %1683 = vmatprep.subr.bf16.mxu0 0
    %1684 = vmatpush2.bf16.msra.mxu0 %v1641
    %1685 = vmatprep.subr.bf16.mxu0 0
    %1686 = vmatpush2.bf16.msra.mxu0 %v1640
    %1687 = vmatprep.subr.bf16.mxu0 0
    %1688 = vmatpush2.bf16.msra.mxu0 %v1639
    %1689 = vmatprep.subr.bf16.mxu0 0
    %1690 = vmatpush2.bf16.msra.mxu0 %v1638
    %1691 = vmatprep.subr.bf16.mxu0 0
    %1692 = vmatpush2.bf16.msra.mxu0 %v1637
    %1693 = vmatprep.mubr.bf16.mxu0 %v1525
    %1694 = vmatmul.mubr.bf16.gmra.mxu0 %v1524
    %v1695 = vpop.f32.mrf.mxu0
    %v1696 = vadd.f32 %v1563, %v1695
    %v1697 = vpop.f32.mrf.mxu0
    %v1698 = vpop.f32.mrf.mxu0
    %v1699 = vadd.f32 %v1563, %v1698
    %v1700 = vpop.f32.mrf.mxu0
    %1701 = vdwg.mxu0
    %1702 = vst [vmem:[%s5] sm:$0xff] %v1696
    %1703 = vst [vmem:[%s5 + $0x8] sm:$0xff] %v1699
    // Predicated region
    $region34: #{output_layer_inceptionv4.1} parent=1 // pred_check
      _
    $region35: #{output_layer_inceptionv4.1} parent=1 // pred_check_branch
      %1705 = sbr.rel (0) target = $region37
    $region36: #{output_layer_inceptionv4.1} parent=1 // pred_region
      _
    $region37: #{output_layer_inceptionv4.1} parent=1 // pred_fallthru
      _
    // Predicated region
    $region38: #{output_layer_inceptionv4.1} parent=1 // pred_check
      _
    $region39: #{output_layer_inceptionv4.1} parent=1 // pred_check_branch
      %1707 = sbr.rel (0) target = $region41
    $region40: #{output_layer_inceptionv4.1} parent=1 // pred_region
      _
    $region41: #{output_layer_inceptionv4.1} parent=1 // pred_fallthru
      _
    %1708 = vsyncpa [#allocation3], 1
    %1709 = vsyncpa [#allocation5], 1

</llo_original>
